<compile_context>
chip_gen: v7x
topology: tpu7x:2x2x1
jax: 0.10.0
libtpu: 0.0.40
codegen_flags: <defaults>
</compile_context>

<pallas_src>
import functools

import jax
import jax.numpy as jnp
from jax.experimental import pallas as pl
from jax.experimental.pallas import tpu as pltpu

LANES = 128
SUBLANES = 8
TARGET_BLOCK_BYTES = 4 * 1024 * 1024   # per-input, per-grid-step HBM block
VMEM_LIMIT_BYTES = 48 * 1024 * 1024    # explicit scoped-VMEM limit (all gens)
SMALL_INPUT_BYTES = 256 * 1024         # below this total size, skip the kernel


def _round_up(x, m):
    return ((x + m - 1) // m) * m


def _num_tensorcores():
    """Best-effort TensorCore count per chip (v7x has 2; v5e/v6e have 1)."""
    try:
        kind = jax.devices()[0].device_kind.lower()
    except Exception:
        return 1
    if "v7" in kind or "tpu7" in kind:
        return 2
    return 1


def _pick_chunking(row_tile, sub_mult):
    """Split a block into <=8 packing-aligned chunks to bound the live f32 diff."""
    for n_chunks in (8, 4, 2):
        if row_tile % (n_chunks * sub_mult) == 0:
            return n_chunks, row_tile // n_chunks
    return 1, row_tile


def _l1_sum_kernel(p_ref, t_ref, o_ref, *, row_tile, valid_rows, steps,
                   multi_slice, needs_mask, n_chunks, chunk_rows):
    """Accumulate per-slice sum(|p - t|) into an (8, 128) resident f32 block."""
    if multi_slice:
        slice_id = pl.program_id(0)
        step = pl.program_id(1)          # reduction ("arbitrary") axis
    else:
        slice_id = 0
        step = pl.program_id(0)

    @pl.when(step == 0)
    def _():
        o_ref[...] = jnp.zeros_like(o_ref)

    # UNCLAMPED global tile index: the in_spec index_map clamps duplicate tiles
    # onto the last real tile, but the mask below uses the true index, so those
    # duplicates (and rows past the array end) contribute exactly zero.
    g = slice_id * steps + step
    tile_row0 = g * row_tile

    def chunk_abs_sum(start, apply_mask):
        p = p_ref[pl.ds(start, chunk_rows), :].astype(jnp.float32)
        t = t_ref[pl.ds(start, chunk_rows), :].astype(jnp.float32)
        d = jnp.abs(p - t)
        if apply_mask:
            row_ids = (tile_row0 + start
                       + jax.lax.broadcasted_iota(jnp.int32, d.shape, 0))
            # Must stay a select (not a multiply): out-of-bounds rows may hold
            # garbage/NaN from the padded boundary DMA.
            d = jnp.where(row_ids < valid_rows, d, 0.0)
        # Fold the chunk down to an (8, 128) slab on the VPU.
        return d.reshape(chunk_rows // SUBLANES, SUBLANES, LANES).sum(axis=0)

    def partial_sum(apply_mask):
        if n_chunks == 1:
            return chunk_abs_sum(0, apply_mask)

        def body(c, acc):
            start = pl.multiple_of(c * chunk_rows, SUBLANES)
            return acc + chunk_abs_sum(start, apply_mask)

        zero = jnp.zeros((SUBLANES, LANES), jnp.float32)
        return jax.lax.fori_loop(0, n_chunks, body, zero)

    if not needs_mask:
        o_ref[...] += partial_sum(False)
    else:
        interior = (g + 1) * row_tile <= valid_rows

        @pl.when(interior)
        def _():
            o_ref[...] += partial_sum(False)

        @pl.when(jnp.logical_not(interior))
        def _():
            o_ref[...] += partial_sum(True)


def _l1_partial_sums(p2d, t2d, rows, row_tile, sub_mult, num_slices):
    """Run the streaming-reduction kernel; returns (8,128) or (S,8,128) partials."""
    n_chunks, chunk_rows = _pick_chunking(row_tile, sub_mult)
    total_tiles = pl.cdiv(rows, row_tile)

    if num_slices > 1 and total_tiles >= num_slices:
        steps = pl.cdiv(total_tiles, num_slices)
        grid = (num_slices, steps)
        multi_slice = True
        grid_tiles = num_slices * steps

        def in_map(c, i):
            # Clamp so duplicate tiles of the last slice never issue a fully
            # out-of-bounds DMA; the kernel masks their rows to zero.
            return (jnp.minimum(c * steps + i, total_tiles - 1), 0)

        out_shape = jax.ShapeDtypeStruct((num_slices, SUBLANES, LANES), jnp.float32)
        out_spec = pl.BlockSpec((None, SUBLANES, LANES), lambda c, i: (c, 0, 0))
        core_parallel = getattr(pltpu, "CORE_PARALLEL", "parallel")
        arbitrary = getattr(pltpu, "ARBITRARY", "arbitrary")
        dim_sem = (core_parallel, arbitrary)
    else:
        steps = total_tiles
        grid = (steps,)
        multi_slice = False
        grid_tiles = steps

        def in_map(i):
            return (i, 0)

        out_shape = jax.ShapeDtypeStruct((SUBLANES, LANES), jnp.float32)
        out_spec = pl.BlockSpec((SUBLANES, LANES), lambda i: (0, 0))
        dim_sem = ("arbitrary",)

    needs_mask = (grid_tiles * row_tile) != rows

    kernel = functools.partial(
        _l1_sum_kernel,
        row_tile=row_tile,
        valid_rows=rows,
        steps=steps,
        multi_slice=multi_slice,
        needs_mask=needs_mask,
        n_chunks=n_chunks,
        chunk_rows=chunk_rows,
    )

    return pl.pallas_call(
        kernel,
        out_shape=out_shape,
        grid_spec=pltpu.PrefetchScalarGridSpec(
            num_scalar_prefetch=0,
            grid=grid,
            in_specs=[
                pl.BlockSpec((row_tile, LANES), in_map),
                pl.BlockSpec((row_tile, LANES), in_map),
            ],
            out_specs=out_spec,
        ),
        compiler_params=pltpu.CompilerParams(
            dimension_semantics=dim_sem,
            vmem_limit_bytes=VMEM_LIMIT_BYTES,
        ),
    )(p2d, t2d)


def l1_loss(predicted, target, *, force_pallas=False):
    """Mean absolute error over all elements (matches torch.nn.L1Loss())."""
    assert predicted.shape == target.shape, "L1Loss requires matching shapes"
    n_elems = predicted.size

    total_bytes = (n_elems * predicted.dtype.itemsize
                   + n_elems * target.dtype.itemsize)
    if (not force_pallas) and total_bytes < SMALL_INPUT_BYTES:
        # Tiny inputs: kernel launch/pipeline warmup dominates — plain XLA wins.
        return jnp.mean(jnp.abs(predicted.astype(jnp.float32)
                                - target.astype(jnp.float32)))

    # Contiguous flatten is free; keep native dtype (cast happens in-kernel).
    p_flat = predicted.reshape(-1)
    t_flat = target.reshape(-1)

    # Ragged tail (< 128 elems): reduce in the wrapper instead of jnp.pad-ing
    # (a pad would rewrite both full inputs — 2-3x extra HBM traffic).
    main_elems = (n_elems // LANES) * LANES
    tail_sum = jnp.float32(0.0)
    if main_elems != n_elems:
        tail_sum = jnp.sum(
            jnp.abs(p_flat[main_elems:].astype(jnp.float32)
                    - t_flat[main_elems:].astype(jnp.float32)))
    if main_elems == 0:
        return tail_sum / jnp.float32(n_elems)

    rows = main_elems // LANES
    p2d = p_flat[:main_elems].reshape(rows, LANES)
    t2d = t_flat[:main_elems].reshape(rows, LANES)

    # Dtype-aware tiling: constant ~4 MiB per input block regardless of dtype,
    # rows rounded to the packed-sublane multiple (f32:8, bf16:16, int8/fp8:32).
    itemsize_small = min(predicted.dtype.itemsize, target.dtype.itemsize)
    itemsize_large = max(predicted.dtype.itemsize, target.dtype.itemsize)
    sub_mult = max(SUBLANES, 32 // max(1, itemsize_small))
    max_rows = max(sub_mult,
                   (TARGET_BLOCK_BYTES // (LANES * itemsize_large))
                   // sub_mult * sub_mult)
    row_tile = min(max_rows, _round_up(rows, sub_mult))

    partials = _l1_partial_sums(p2d, t2d, rows, row_tile, sub_mult,
                                _num_tensorcores())

    # Tiny final reduce (<= 2*8*128 f32) + divide by the true element count.
    # TODO(synk): PyTorch's .item() returns a host python float; we return a
    # 0-d f32 array (callers can float(...) it).
    return (jnp.sum(partials) + tail_sum) / jnp.float32(n_elems)


if __name__ == "__main__":
    key = jax.random.PRNGKey(0)
    k1, k2, k3, k4 = jax.random.split(key, 4)

    # Small NCHW-style tensors consistent with the module: batch=2, channels=4,
    # spatial=16x16. (Below the fast-path threshold, so force the kernel path.)
    predicted = jax.random.normal(k1, (2, 4, 16, 16), dtype=jnp.float32)
    target = jax.random.normal(k2, (2, 4, 16, 16), dtype=jnp.float32)

    loss = l1_loss(predicted, target, force_pallas=True)
    jax.block_until_ready(loss)
    ref = jnp.mean(jnp.abs(predicted - target))
    assert jnp.allclose(loss, ref, rtol=1e-6, atol=1e-6), (loss, ref)

    # Default dispatch (small-input fast path) must agree as well.
    loss_fast = l1_loss(predicted, target)
    jax.block_until_ready(loss_fast)
    assert jnp.allclose(loss_fast, ref, rtol=1e-6, atol=1e-6), (loss_fast, ref)

    # Larger ragged shape: exercises multi-step grid, resident accumulator,
    # boundary-only masking, chunked reduction and the <128-element tail path.
    p_big = jax.random.normal(k3, (9, 9, 120, 121), dtype=jnp.float32)
    t_big = jax.random.normal(k4, (9, 9, 120, 121), dtype=jnp.float32)
    loss_big = l1_loss(p_big, t_big)
    jax.block_until_ready(loss_big)
    ref_big = jnp.mean(jnp.abs(p_big - t_big))
    assert jnp.allclose(loss_big, ref_big, rtol=1e-4, atol=1e-6), (loss_big, ref_big)

    print("KERNEL_OK")
</pallas_src>

<mosaic_0001>
module attributes {stable_mosaic.version = 11 : i64} {
  func.func @_l1_sum_kernel(%arg0: i32, %arg1: memref<16x128xf32, #tpu.memory_space<vmem>>, %arg2: memref<16x128xf32, #tpu.memory_space<vmem>>, %arg3: memref<8x128xf32, #tpu.memory_space<vmem>>) attributes {dimension_semantics = [#tpu.dimension_semantics<arbitrary>], iteration_bounds = array<i64: 1>, scalar_prefetch = 0 : i64, scratch_operands = 0 : i64, tpu.core_type = #tpu.core_type<tc>, window_params = [{transform_indices = @transform_0, window_bounds = array<i64: 16, 128>}, {transform_indices = @transform_1, window_bounds = array<i64: 16, 128>}, {pipeline_mode = #tpu.pipeline_mode<synchronous>, transform_indices = @transform_2, window_bounds = array<i64: 8, 128>}]} {
    %c0_i32 = arith.constant 0 : i32
    %0 = arith.cmpi eq, %arg0, %c0_i32 : i32
    %1 = arith.extui %0 : i1 to i32
    %c0_i32_0 = arith.constant 0 : i32
    %2 = arith.cmpi ne, %1, %c0_i32_0 : i32
    scf.if %2 {
      %cst_6 = arith.constant 0.000000e+00 : f32
      %9 = vector.broadcast %cst_6 : f32 to vector<8x128xf32>
      %c0_7 = arith.constant 0 : index
      %c0_8 = arith.constant 0 : index
      %10 = vector.load %arg3[%c0_7, %c0_8] : memref<8x128xf32, #tpu.memory_space<vmem>>, vector<8x128xf32>
      tpu.vector_store %arg3[%c0_7, %c0_8], %9 {strides = array<i32>} : memref<8x128xf32, #tpu.memory_space<vmem>>, vector<8x128xf32>,
    } else {
    }
    %c0 = arith.constant 0 : index
    %c0_1 = arith.constant 0 : index
    %3 = vector.load %arg3[%c0, %c0_1] : memref<8x128xf32, #tpu.memory_space<vmem>>, vector<8x128xf32>
    %cst = arith.constant 0.000000e+00 : f32
    %4 = vector.broadcast %cst : f32 to vector<8x128xf32>
    %c0_i32_2 = arith.constant 0 : i32
    %c2_i32 = arith.constant 2 : i32
    %5 = arith.addi %c0_i32_2, %c2_i32 : i32
    %c1_i32 = arith.constant 1 : i32
    %6 = scf.for %arg4 = %c0_i32_2 to %5 step %c1_i32 iter_args(%arg5 = %4) -> (vector<8x128xf32>)  : i32 {
      %c8_i32 = arith.constant 8 : i32
      %9 = arith.muli %arg4, %c8_i32 : i32
      %10 = tpu.assume_multiple %9, 8 : i32
      %11 = arith.index_cast %10 : i32 to index
      %c0_6 = arith.constant 0 : index
      %12 = vector.load %arg1[%11, %c0_6] : memref<16x128xf32, #tpu.memory_space<vmem>>, vector<8x128xf32>
      %13 = arith.index_cast %10 : i32 to index
      %c0_7 = arith.constant 0 : index
      %14 = vector.load %arg2[%13, %c0_7] : memref<16x128xf32, #tpu.memory_space<vmem>>, vector<8x128xf32>
      %15 = arith.subf %12, %14 : vector<8x128xf32>
      %16 = math.absf %15 : vector<8x128xf32>
      %17 = vector.shape_cast %16 : vector<8x128xf32> to vector<1x8x128xf32>
      %cst_8 = arith.constant dense<0.000000e+00> : vector<8x128xf32>
      %18 = vector.multi_reduction <add>, %17, %cst_8 [0] : vector<1x8x128xf32> to vector<8x128xf32>
      %19 = arith.addf %arg5, %18 : vector<8x128xf32>
      scf.yield %19 : vector<8x128xf32>
    }
    %c2_i32_3 = arith.constant 2 : i32
    %7 = arith.addf %3, %6 : vector<8x128xf32>
    %c0_4 = arith.constant 0 : index
    %c0_5 = arith.constant 0 : index
    %8 = vector.load %arg3[%c0_4, %c0_5] : memref<8x128xf32, #tpu.memory_space<vmem>>, vector<8x128xf32>
    tpu.vector_store %arg3[%c0_4, %c0_5], %7 {strides = array<i32>} : memref<8x128xf32, #tpu.memory_space<vmem>>, vector<8x128xf32>,
    return
  }
  func.func @transform_0(%arg0: i32) -> (i32, i32) {
    %c0_i32 = arith.constant 0 : i32
    %c0_i32_0 = arith.constant 0 : i32
    return %arg0, %c0_i32 : i32, i32
  }
  func.func @transform_1(%arg0: i32) -> (i32, i32) {
    %c0_i32 = arith.constant 0 : i32
    %c0_i32_0 = arith.constant 0 : i32
    return %arg0, %c0_i32 : i32, i32
  }
  func.func @transform_2(%arg0: i32) -> (i32, i32) {
    %c0_i32 = arith.constant 0 : i32
    %c0_i32_0 = arith.constant 0 : i32
    %c0_i32_1 = arith.constant 0 : i32
    return %c0_i32, %c0_i32_0 : i32, i32
  }
}

</mosaic_0001>

<llo_original>
// kernel: tpu_custom_call.1
$region0: #{tpu_custom_call.1}
  #allocation0 [shape = 'u32[]', space=smem, size = 0x4, offset = 0x4, fixed_abs, tag = 'smem constant byte address 0x4 - core index']
  #allocation1 [shape = 'u32[144,128]{1,0:T(1,128)}', space=vmem, size = 0x12000, scoped, tag = 'internal scratch']
  %s0 = inlined_call_operand.hbm [shape: f32[16,128], index: 0, kind: input, shape index: {}]
  %s1 = inlined_call_operand.hbm [shape: f32[16,128], index: 1, kind: input, shape index: {}]
  %s2 = inlined_call_operand.hbm [shape: f32[8,128], index: 2, kind: output, shape index: {}]
  %s3 = sld [smem:[#allocation0]]
  $region37: #{tpu_custom_call.1} parent=0
    _
  %s5 = ssub.s32 1, %s3
  %s6 = scalar_select 0, %s5, %s3
  $region1: #{tpu_custom_call.1} parent=0
    #allocation2 [shape = 'u8[8192]{0}', space=vmem, size = 0x2000, scoped, tag = 'input window, operand 0, single buffered']
    #allocation3 [shape = 's32[1]{0}', space=sflag, size = 0x4, scoped, tag = 'scoped memory for tpu_custom_call.1']
    #allocation4 [shape = 's32[1]{0}', space=sflag, size = 0x4, scoped, tag = 'scoped memory for tpu_custom_call.1']
    #allocation5 [shape = 'u8[8192]{0}', space=vmem, size = 0x2000, scoped, tag = 'input window, operand 1, single buffered']
    #allocation6 [shape = 's32[1]{0}', space=sflag, size = 0x4, scoped, tag = 'scoped memory for tpu_custom_call.1']
    #allocation7 [shape = 'u8[4096]{0}', space=vmem, size = 0x1000, scoped, tag = 'output window, operand 0, single buffered']
    %7 = vsyncpa [#allocation3], 0
    %8 = vsyncpa [#allocation6], 0
    %9 = vsyncpa [#allocation4], 0
    // Predicated region
    $region2: #{tpu_custom_call.1} parent=1 // pred_check
      _
    $region3: #{tpu_custom_call.1} parent=1 // pred_check_branch
      %11 = sbr.rel (0) target = $region5
    $region4: #{tpu_custom_call.1} parent=1 // pred_region
      %s13 = ssub.s32 256, 256
      %14 = vsyncadd [#allocation3], %s13
      %s15 = sshll.u32 [#allocation2], 4
      %s16 = int_to_ptr.vmem [resolvable:$true] %s15
      %21 = dma.hbm_to_vmem [thread:$0]  %s0, 256, %s16, [#allocation3], 128, 128, 8
    $region5: #{tpu_custom_call.1} parent=1 // pred_fallthru
      _
    // Predicated region
    $region6: #{tpu_custom_call.1} parent=1 // pred_check
      _
    $region7: #{tpu_custom_call.1} parent=1 // pred_check_branch
      %23 = sbr.rel (0) target = $region9
    $region8: #{tpu_custom_call.1} parent=1 // pred_region
      %s25 = ssub.s32 256, 256
      %26 = vsyncadd [#allocation6], %s25
      %s27 = sshll.u32 [#allocation5], 4
      %s28 = int_to_ptr.vmem [resolvable:$true] %s27
      %33 = dma.hbm_to_vmem [thread:$0]  %s1, 256, %s28, [#allocation6], 128, 128, 8
    $region9: #{tpu_custom_call.1} parent=1 // pred_fallthru
      _
    // Predicated region
    $region10: #{tpu_custom_call.1} parent=1 // pred_check
      _
    $region11: #{tpu_custom_call.1} parent=1 // pred_check_branch
      %35 = sbr.rel (0) target = $region13
    $region12: #{tpu_custom_call.1} parent=1 // pred_region
      %36 = dma.done [#allocation3], 256
    $region13: #{tpu_custom_call.1} parent=1 // pred_fallthru
      _
    // Predicated region
    $region14: #{tpu_custom_call.1} parent=1 // pred_check
      _
    $region15: #{tpu_custom_call.1} parent=1 // pred_check_branch
      %38 = sbr.rel (0) target = $region17
    $region16: #{tpu_custom_call.1} parent=1 // pred_region
      %39 = dma.done [#allocation6], 256
    $region17: #{tpu_custom_call.1} parent=1 // pred_fallthru
      _
    %p40 = scmp.eq.s32.totalorder 0, 0
    // Predicated region
    $region18: #{tpu_custom_call.1} parent=1 // pred_check
      %p41 = pneg %p40
    $region19: #{tpu_custom_call.1} parent=1 // pred_check_branch
      %43 = sbr.rel (%p41) target = $region21
    $region20: #{tpu_custom_call.1} parent=1 // pred_region
      %44 = vst [vmem:[#allocation7] sm:$0xff] 0.0
    $region21: #{tpu_custom_call.1} parent=1 // pred_fallthru
      _
    %v45 = vld [vmem:[#allocation7] sm:$0xff]
    loop: start=0, step=1, limit=2
    $region22: #{tpu_custom_call.1} parent=1 // loop_pre_header
      _
    $region23: #{tpu_custom_call.1} parent=1 // loop_header
      %s47 = sphi 0, %s51
      %p48 = scmp.ge.s32.totalorder %s47, 2
      %v52 = vphi 0.0, %v61
    $region24: #{tpu_custom_call.1} parent=1 // loop_header_branch
      %50 = sbr.rel (%p48) target = $region28
    $region25: #{tpu_custom_call.1} parent=1 // loop_body
      %s53 = smul.u32 %s47, 8
      %s54 = scalar_lea.vmem [#allocation2], %s53
      %v55 = vld [vmem:[%s54] sm:$0xff]
      %s56 = scalar_lea.vmem [#allocation5], %s53
      %v57 = vld [vmem:[%s56] sm:$0xff]
      %v58 = vsub.f32 %v55, %v57
      %v59 = vand.u32 2147483647, %v58
      %v60 = vadd.f32 %v59, 0.0
      %v61 = vadd.f32 %v52, %v60
    $region26: #{tpu_custom_call.1} parent=1 // loop_footer
      %s51 = sadd.s32 1, %s47
    $region27: #{tpu_custom_call.1} parent=1 // loop_footer_branch
      %46 = sbr.rel target = $region23
    $region28: #{tpu_custom_call.1} parent=1 // loop_exit
      _
    %v62 = vadd.f32 %v45, %v52
    %63 = vst [vmem:[#allocation7] sm:$0xff] %v62
    // Predicated region
    $region29: #{tpu_custom_call.1} parent=1 // pred_check
      _
    $region30: #{tpu_custom_call.1} parent=1 // pred_check_branch
      %65 = sbr.rel (0) target = $region32
    $region31: #{tpu_custom_call.1} parent=1 // pred_region
      %s67 = ssub.s32 128, 128
      %68 = vsyncadd [#allocation4], %s67
      %s70 = sshll.u32 [#allocation7], 4
      %s71 = int_to_ptr.vmem [resolvable:$true] %s70
      %73 = dma.vmem_to_hbm [thread:$0]  %s71, 128, %s2, [#allocation4]
    $region32: #{tpu_custom_call.1} parent=1 // pred_fallthru
      _
    // Predicated region
    $region33: #{tpu_custom_call.1} parent=1 // pred_check
      _
    $region34: #{tpu_custom_call.1} parent=1 // pred_check_branch
      %75 = sbr.rel (0) target = $region36
    $region35: #{tpu_custom_call.1} parent=1 // pred_region
      %76 = dma.done [#allocation4], 128
    $region36: #{tpu_custom_call.1} parent=1 // pred_fallthru
      _
    %77 = vsyncpa [#allocation3], 1
    %78 = vsyncpa [#allocation6], 1
    %79 = vsyncpa [#allocation4], 1

</llo_original>
